<compile_context>
chip_gen: v7x
topology: tpu7x:2x2x1
jax: 0.10.0
libtpu: 0.0.40
codegen_flags: <defaults>
</compile_context>

<pallas_src>
import functools

import jax
import jax.numpy as jnp
import numpy as np
from jax.experimental import pallas as pl
from jax.experimental.pallas import tpu as pltpu


FILTER_ITEMS_DEFAULT = (0, 8, 20, 21, 29, 31, 38, 44, 49)

# Output lane layout (one (1, 128) row per tile):
#   lane 0: sum of entropies, larger group      lane 1: count, larger group
#   lane 2: sum of entropies, smaller group     lane 3: count, smaller group
_OUT_LANES = 128
_VMEM_TILE_BUDGET = 20 << 20     # bytes used for tile sizing (conservative)
_VMEM_LIMIT_BYTES = 40 << 20     # explicit scoped-VMEM request (safe on v5e/v6e/v7x)


def _round_up(x, m):
    return ((x + m - 1) // m) * m


def _pick_tile_n(n_rows, n_classes, in_itemsize,
                 vmem_budget_bytes=_VMEM_TILE_BUDGET, cap=16384):
    """Largest row tile whose per-step working set fits the VMEM budget.

    Per-row accounting (per the review):
      * dists input block lane-padded to round_up(C, 128), double-buffered,
      * lane-dense (1, tile_n) labels block (8 padded sublanes), double-buffered,
      * live in-kernel f32 intermediates: a few (C, tile_n) values plus ~a dozen
        lane-dense (1, tile_n) rows.
    """
    c_lanes = _round_up(n_classes, 128)
    per_row = (2 * c_lanes * in_itemsize      # dists block, double buffered
               + 2 * 8 * 4                    # labels block, double buffered
               + 8 * n_classes * 4            # live (C, tile_n) f32 intermediates
               + 400)                         # live (1, tile_n) lane-dense rows
    tile = min(cap, max(8, vmem_budget_bytes // per_row))
    n8 = _round_up(n_rows, 8)
    if tile >= n8 and n8 > 2048:
        # v7x megacore: keep >=2 "parallel" grid steps when there is enough work.
        tile = _round_up(pl.cdiv(n8, 2), 128)
    tile = min(tile, n8)
    tile = (tile // 128) * 128 if tile >= 128 else (tile // 8) * 8
    return max(8, tile)


def _relation_loss_kernel(dists_ref, labels_ref, part_ref, *, n_rows, filter_items):
    """One row tile: transposed per-sample CE + group reduction to 4 scalars."""
    tile_n, num_classes = dists_ref.shape

    # Lane-dense labels for this tile: (1, tile_n) int32.
    lbl = labels_ref[0]

    # ---- Transpose logits to (C, tile_n): classes -> sublanes, samples -> lanes.
    d_in = dists_ref[...]
    if num_classes <= 128:
        # Exact transpose as identity @ d^T on the (otherwise idle) MXU; also
        # fuses the f32 upcast.  The C^2 * tile_n MAC overhead is negligible for
        # C <= 128, and the A @ B^T dot_general pattern lowers robustly.
        ci = jax.lax.broadcasted_iota(jnp.int32, (num_classes, num_classes), 0)
        cj = jax.lax.broadcasted_iota(jnp.int32, (num_classes, num_classes), 1)
        eye = (ci == cj).astype(d_in.dtype)
        d_t = jax.lax.dot_general(eye, d_in, (((1,), (1,)), ((), ())),
                                  preferred_element_type=jnp.float32)
    else:
        # Large C: lane-padding waste is gone anyway; use the XLU transpose.
        d_t = jnp.transpose(d_in).astype(jnp.float32)

    # ---- Per-sample cross entropy; every per-sample vector is lane-dense (1, tile_n).
    m = jnp.max(d_t, axis=0, keepdims=True)                           # (1, TN)
    sumexp = jnp.sum(jnp.exp(d_t - m), axis=0, keepdims=True)         # (1, TN)
    lse = m + jnp.log(sumexp)                                         # (1, TN)

    cls_iota = jax.lax.broadcasted_iota(jnp.int32, d_t.shape, 0)      # (C, TN)
    onehot = (cls_iota == lbl).astype(jnp.float32)                    # (C, TN)
    picked = jnp.sum(d_t * onehot, axis=0, keepdims=True)             # (1, TN)
    ent = lse - picked                                                # -log_softmax[label]

    # ---- Group masks (lane-dense).  Rows past N (ragged last tile) and labels
    #      outside [0, C) are excluded from both groups.
    row0 = pl.program_id(0) * tile_n
    rows = row0 + jax.lax.broadcasted_iota(jnp.int32, (1, tile_n), 1)
    valid = jnp.logical_and(rows < n_rows,
                            jnp.logical_and(lbl >= 0, lbl < num_classes))
    in_filter = jnp.zeros(lbl.shape, dtype=jnp.bool_)
    for f in filter_items:                       # cheap: lane-dense compares
        in_filter = jnp.logical_or(in_filter, lbl == f)
    is_larger = jnp.logical_and(in_filter, valid)
    is_smaller = jnp.logical_and(jnp.logical_not(in_filter), valid)

    sum_l = jnp.sum(jnp.where(is_larger, ent, 0.0), axis=1, keepdims=True)
    cnt_l = jnp.sum(is_larger.astype(jnp.float32), axis=1, keepdims=True)
    sum_s = jnp.sum(jnp.where(is_smaller, ent, 0.0), axis=1, keepdims=True)
    cnt_s = jnp.sum(is_smaller.astype(jnp.float32), axis=1, keepdims=True)

    # One unmasked, lane-dense (1, 128) store per tile.
    lane = jax.lax.broadcasted_iota(jnp.int32, (1, _OUT_LANES), 1)
    part_ref[0] = (jnp.where(lane == 0, sum_l, 0.0)
                   + jnp.where(lane == 1, cnt_l, 0.0)
                   + jnp.where(lane == 2, sum_s, 0.0)
                   + jnp.where(lane == 3, cnt_s, 0.0))


def relation_loss(dists, labels, filter_items=FILTER_ITEMS_DEFAULT):
    """dists: (N, C) float (f32 or bf16), labels: (N,) int.

    Returns (larger_loss, smaller_loss) as f32 scalars.
    """
    n, c = dists.shape
    tile_n = _pick_tile_n(n, c, jnp.dtype(dists.dtype).itemsize)
    num_tiles = pl.cdiv(n, tile_n)
    n_pad = num_tiles * tile_n

    labels = labels.astype(jnp.int32)
    if n_pad != n:
        # Only the tiny labels vector is padded; the dists ragged last tile is
        # masked in-kernel instead of materializing a padded HBM copy.
        labels = jnp.pad(labels, (0, n_pad - n), constant_values=-1)
    labels_blk = labels.reshape(num_tiles, 1, tile_n)   # lane-dense per-tile blocks

    kernel = functools.partial(
        _relation_loss_kernel, n_rows=n,
        filter_items=tuple(int(f) for f in filter_items))

    partials = pl.pallas_call(
        kernel,
        out_shape=jax.ShapeDtypeStruct((num_tiles, 1, _OUT_LANES), jnp.float32),
        grid_spec=pltpu.PrefetchScalarGridSpec(
            num_scalar_prefetch=0,
            grid=(num_tiles,),
            in_specs=[
                # dists: big unpadded row tile, pipelined (ragged tail masked in-kernel).
                pl.BlockSpec((tile_n, c), lambda i: (i, 0)),
                # labels: lane-dense (1, tile_n) block per grid step.
                pl.BlockSpec((1, 1, tile_n), lambda i: (i, 0, 0)),
            ],
            out_specs=pl.BlockSpec((1, 1, _OUT_LANES), lambda i: (i, 0, 0)),
        ),
        compiler_params=pltpu.CompilerParams(
            dimension_semantics=("parallel",),
            vmem_limit_bytes=_VMEM_LIMIT_BYTES),
    )(dists, labels_blk)

    # One lane-dense reduction over tiles, then pick the 4 payload lanes.
    totals = jnp.sum(partials[:, 0, :], axis=0)          # (128,)
    sum_l, cnt_l, sum_s, cnt_s = totals[0], totals[1], totals[2], totals[3]

    larger_loss = jnp.where(cnt_l > 0, sum_l / jnp.maximum(cnt_l, 1.0), 0.0)
    smaller_loss = jnp.where(cnt_s > 0, sum_s / jnp.maximum(cnt_s, 1.0), 0.0)
    return larger_loss, smaller_loss


def _reference_relation_loss(dists, labels, filter_items):
    """Pure-JAX reference mirroring the PyTorch forward (empty group -> 0)."""
    logp = jax.nn.log_softmax(dists.astype(jnp.float32), axis=-1)
    ent = -jnp.take_along_axis(
        logp, labels.reshape(-1, 1).astype(jnp.int32), axis=1).reshape(-1)
    in_f = jnp.zeros(labels.shape, dtype=bool)
    for f in filter_items:
        in_f = jnp.logical_or(in_f, labels == f)
    cnt_l = jnp.sum(in_f)
    cnt_s = jnp.sum(jnp.logical_not(in_f))
    larger = jnp.where(cnt_l > 0,
                       jnp.sum(jnp.where(in_f, ent, 0.0)) / jnp.maximum(cnt_l, 1),
                       0.0)
    smaller = jnp.where(cnt_s > 0,
                        jnp.sum(jnp.where(in_f, 0.0, ent)) / jnp.maximum(cnt_s, 1),
                        0.0)
    return larger, smaller


if __name__ == "__main__":
    key = jax.random.PRNGKey(0)
    k1, k2 = jax.random.split(key)

    N, C = 64, 32  # 64 candidate relations, 32 predicate classes
    dists = jax.random.normal(k1, (N, C), dtype=jnp.float32)
    labels = jax.random.randint(k2, (N,), 0, C, dtype=jnp.int32)
    # Deterministically guarantee both groups are non-empty.
    labels = labels.at[:4].set(jnp.array([0, 8, 3, 5], dtype=jnp.int32))

    loss_fn = jax.jit(relation_loss, static_argnames=("filter_items",))
    larger, smaller = jax.block_until_ready(loss_fn(dists, labels))

    ref_l, ref_s = jax.block_until_ready(
        _reference_relation_loss(dists, labels, FILTER_ITEMS_DEFAULT))

    np.testing.assert_allclose(np.asarray(larger), np.asarray(ref_l),
                               rtol=1e-5, atol=1e-5)
    np.testing.assert_allclose(np.asarray(smaller), np.asarray(ref_s),
                               rtol=1e-5, atol=1e-5)

    print("KERNEL_OK")
</pallas_src>

<mosaic_0001>
module attributes {stable_mosaic.version = 11 : i64} {
  func.func @_relation_loss_kernel(%arg0: i32, %arg1: memref<64x32xf32, #tpu.memory_space<vmem>>, %arg2: memref<1x1x64xi32, #tpu.memory_space<vmem>>, %arg3: memref<1x1x128xf32, #tpu.memory_space<vmem>>) attributes {dimension_semantics = [#tpu.dimension_semantics<parallel>], iteration_bounds = array<i64: 1>, scalar_prefetch = 0 : i64, scratch_operands = 0 : i64, tpu.core_type = #tpu.core_type<tc>, window_params = [{transform_indices = @transform_0, window_bounds = array<i64: 64, 32>}, {transform_indices = @transform_1, window_bounds = array<i64: 1, 1, 64>}, {transform_indices = @transform_2, window_bounds = array<i64: 1, 1, 128>}]} {
    %c0 = arith.constant 0 : index
    %c0_0 = arith.constant 0 : index
    %c0_1 = arith.constant 0 : index
    %0 = vector.load %arg2[%c0, %c0_0, %c0_1] : memref<1x1x64xi32, #tpu.memory_space<vmem>>, vector<1x1x64xi32>
    %1 = vector.shape_cast %0 : vector<1x1x64xi32> to vector<1x64xi32>
    %c0_2 = arith.constant 0 : index
    %c0_3 = arith.constant 0 : index
    %2 = vector.load %arg1[%c0_2, %c0_3] : memref<64x32xf32, #tpu.memory_space<vmem>>, vector<64x32xf32>
    %3 = tpu.iota {dimensions = array<i32: 0>} : vector<32x32xi32>
    %4 = tpu.iota {dimensions = array<i32: 1>} : vector<32x32xi32>
    %5 = arith.cmpi eq, %3, %4 : vector<32x32xi32>
    %6 = arith.extui %5 : vector<32x32xi1> to vector<32x32xi32>
    %7 = arith.sitofp %6 : vector<32x32xi32> to vector<32x32xf32>
    %cst = arith.constant dense<0.000000e+00> : vector<32x64xf32>
    %8 = tpu.matmul %7, %2, %cst {dimension_numbers = #tpu.dot_dimension_numbers<[1], [1], [0], [0], [0, 0, 1, 0], [], []>} : vector<32x32xf32>, vector<64x32xf32>, vector<32x64xf32> -> vector<32x64xf32>
    %cst_4 = arith.constant dense<0xFF800000> : vector<64xf32>
    %9 = vector.multi_reduction <maximumf>, %8, %cst_4 [0] : vector<32x64xf32> to vector<64xf32>
    %10 = vector.shape_cast %9 : vector<64xf32> to vector<1x64xf32>
    %11 = vector.broadcast %10 : vector<1x64xf32> to vector<32x64xf32>
    %12 = arith.subf %8, %11 : vector<32x64xf32>
    %13 = math.exp %12 : vector<32x64xf32>
    %cst_5 = arith.constant dense<0.000000e+00> : vector<64xf32>
    %14 = vector.multi_reduction <add>, %13, %cst_5 [0] : vector<32x64xf32> to vector<64xf32>
    %15 = vector.shape_cast %14 : vector<64xf32> to vector<1x64xf32>
    %16 = math.log %15 : vector<1x64xf32>
    %17 = arith.addf %10, %16 : vector<1x64xf32>
    %18 = tpu.iota {dimensions = array<i32: 0>} : vector<32x64xi32>
    %19 = vector.broadcast %1 : vector<1x64xi32> to vector<32x64xi32>
    %20 = arith.cmpi eq, %18, %19 : vector<32x64xi32>
    %21 = arith.extui %20 : vector<32x64xi1> to vector<32x64xi32>
    %22 = arith.sitofp %21 : vector<32x64xi32> to vector<32x64xf32>
    %23 = arith.mulf %8, %22 : vector<32x64xf32>
    %cst_6 = arith.constant dense<0.000000e+00> : vector<64xf32>
    %24 = vector.multi_reduction <add>, %23, %cst_6 [0] : vector<32x64xf32> to vector<64xf32>
    %25 = vector.shape_cast %24 : vector<64xf32> to vector<1x64xf32>
    %26 = arith.subf %17, %25 : vector<1x64xf32>
    %c64_i32 = arith.constant 64 : i32
    %27 = arith.muli %arg0, %c64_i32 : i32
    %28 = tpu.iota {dimensions = array<i32: 1>} : vector<1x64xi32>
    %29 = vector.broadcast %27 : i32 to vector<1x64xi32>
    %30 = arith.addi %29, %28 : vector<1x64xi32>
    %c64_i32_7 = arith.constant 64 : i32
    %31 = vector.broadcast %c64_i32_7 : i32 to vector<1x64xi32>
    %32 = arith.cmpi slt, %30, %31 : vector<1x64xi32>
    %c0_i32 = arith.constant 0 : i32
    %33 = vector.broadcast %c0_i32 : i32 to vector<1x64xi32>
    %34 = arith.cmpi sge, %1, %33 : vector<1x64xi32>
    %c32_i32 = arith.constant 32 : i32
    %35 = vector.broadcast %c32_i32 : i32 to vector<1x64xi32>
    %36 = arith.cmpi slt, %1, %35 : vector<1x64xi32>
    %37 = arith.andi %34, %36 : vector<1x64xi1>
    %38 = arith.andi %32, %37 : vector<1x64xi1>
    %false = arith.constant false
    %39 = vector.broadcast %false : i1 to vector<1x64xi1>
    %c0_i32_8 = arith.constant 0 : i32
    %40 = vector.broadcast %c0_i32_8 : i32 to vector<1x64xi32>
    %41 = arith.cmpi eq, %1, %40 : vector<1x64xi32>
    %42 = arith.ori %39, %41 : vector<1x64xi1>
    %c8_i32 = arith.constant 8 : i32
    %43 = vector.broadcast %c8_i32 : i32 to vector<1x64xi32>
    %44 = arith.cmpi eq, %1, %43 : vector<1x64xi32>
    %45 = arith.ori %42, %44 : vector<1x64xi1>
    %c20_i32 = arith.constant 20 : i32
    %46 = vector.broadcast %c20_i32 : i32 to vector<1x64xi32>
    %47 = arith.cmpi eq, %1, %46 : vector<1x64xi32>
    %48 = arith.ori %45, %47 : vector<1x64xi1>
    %c21_i32 = arith.constant 21 : i32
    %49 = vector.broadcast %c21_i32 : i32 to vector<1x64xi32>
    %50 = arith.cmpi eq, %1, %49 : vector<1x64xi32>
    %51 = arith.ori %48, %50 : vector<1x64xi1>
    %c29_i32 = arith.constant 29 : i32
    %52 = vector.broadcast %c29_i32 : i32 to vector<1x64xi32>
    %53 = arith.cmpi eq, %1, %52 : vector<1x64xi32>
    %54 = arith.ori %51, %53 : vector<1x64xi1>
    %c31_i32 = arith.constant 31 : i32
    %55 = vector.broadcast %c31_i32 : i32 to vector<1x64xi32>
    %56 = arith.cmpi eq, %1, %55 : vector<1x64xi32>
    %57 = arith.ori %54, %56 : vector<1x64xi1>
    %c38_i32 = arith.constant 38 : i32
    %58 = vector.broadcast %c38_i32 : i32 to vector<1x64xi32>
    %59 = arith.cmpi eq, %1, %58 : vector<1x64xi32>
    %60 = arith.ori %57, %59 : vector<1x64xi1>
    %c44_i32 = arith.constant 44 : i32
    %61 = vector.broadcast %c44_i32 : i32 to vector<1x64xi32>
    %62 = arith.cmpi eq, %1, %61 : vector<1x64xi32>
    %63 = arith.ori %60, %62 : vector<1x64xi1>
    %c49_i32 = arith.constant 49 : i32
    %64 = vector.broadcast %c49_i32 : i32 to vector<1x64xi32>
    %65 = arith.cmpi eq, %1, %64 : vector<1x64xi32>
    %66 = arith.ori %63, %65 : vector<1x64xi1>
    %67 = arith.andi %66, %38 : vector<1x64xi1>
    %cst_9 = arith.constant dense<true> : vector<1x64xi1>
    %68 = arith.xori %66, %cst_9 : vector<1x64xi1>
    %69 = arith.andi %68, %38 : vector<1x64xi1>
    %cst_10 = arith.constant 0.000000e+00 : f32
    %70 = vector.broadcast %cst_10 : f32 to vector<1x64xf32>
    %71 = arith.select %67, %26, %70 : vector<1x64xi1>, vector<1x64xf32>
    %cst_11 = arith.constant dense<0.000000e+00> : vector<1xf32>
    %72 = vector.multi_reduction <add>, %71, %cst_11 [1] : vector<1x64xf32> to vector<1xf32>
    %73 = vector.shape_cast %72 : vector<1xf32> to vector<1x1xf32>
    %74 = arith.extui %67 : vector<1x64xi1> to vector<1x64xi32>
    %75 = arith.sitofp %74 : vector<1x64xi32> to vector<1x64xf32>
    %cst_12 = arith.constant dense<0.000000e+00> : vector<1xf32>
    %76 = vector.multi_reduction <add>, %75, %cst_12 [1] : vector<1x64xf32> to vector<1xf32>
    %77 = vector.shape_cast %76 : vector<1xf32> to vector<1x1xf32>
    %cst_13 = arith.constant 0.000000e+00 : f32
    %78 = vector.broadcast %cst_13 : f32 to vector<1x64xf32>
    %79 = arith.select %69, %26, %78 : vector<1x64xi1>, vector<1x64xf32>
    %cst_14 = arith.constant dense<0.000000e+00> : vector<1xf32>
    %80 = vector.multi_reduction <add>, %79, %cst_14 [1] : vector<1x64xf32> to vector<1xf32>
    %81 = vector.shape_cast %80 : vector<1xf32> to vector<1x1xf32>
    %82 = arith.extui %69 : vector<1x64xi1> to vector<1x64xi32>
    %83 = arith.sitofp %82 : vector<1x64xi32> to vector<1x64xf32>
    %cst_15 = arith.constant dense<0.000000e+00> : vector<1xf32>
    %84 = vector.multi_reduction <add>, %83, %cst_15 [1] : vector<1x64xf32> to vector<1xf32>
    %85 = vector.shape_cast %84 : vector<1xf32> to vector<1x1xf32>
    %86 = tpu.iota {dimensions = array<i32: 1>} : vector<1x128xi32>
    %c0_i32_16 = arith.constant 0 : i32
    %87 = vector.broadcast %c0_i32_16 : i32 to vector<1x128xi32>
    %88 = arith.cmpi eq, %86, %87 : vector<1x128xi32>
    %cst_17 = arith.constant 0.000000e+00 : f32
    %89 = vector.shape_cast %73 : vector<1x1xf32> to vector<1x1xf32>
    %90 = vector.broadcast %89 : vector<1x1xf32> to vector<1x128xf32>
    %91 = vector.broadcast %cst_17 : f32 to vector<1x128xf32>
    %92 = arith.select %88, %90, %91 : vector<1x128xi1>, vector<1x128xf32>
    %c1_i32 = arith.constant 1 : i32
    %93 = vector.broadcast %c1_i32 : i32 to vector<1x128xi32>
    %94 = arith.cmpi eq, %86, %93 : vector<1x128xi32>
    %cst_18 = arith.constant 0.000000e+00 : f32
    %95 = vector.shape_cast %77 : vector<1x1xf32> to vector<1x1xf32>
    %96 = vector.broadcast %95 : vector<1x1xf32> to vector<1x128xf32>
    %97 = vector.broadcast %cst_18 : f32 to vector<1x128xf32>
    %98 = arith.select %94, %96, %97 : vector<1x128xi1>, vector<1x128xf32>
    %99 = arith.addf %92, %98 : vector<1x128xf32>
    %c2_i32 = arith.constant 2 : i32
    %100 = vector.broadcast %c2_i32 : i32 to vector<1x128xi32>
    %101 = arith.cmpi eq, %86, %100 : vector<1x128xi32>
    %cst_19 = arith.constant 0.000000e+00 : f32
    %102 = vector.shape_cast %81 : vector<1x1xf32> to vector<1x1xf32>
    %103 = vector.broadcast %102 : vector<1x1xf32> to vector<1x128xf32>
    %104 = vector.broadcast %cst_19 : f32 to vector<1x128xf32>
    %105 = arith.select %101, %103, %104 : vector<1x128xi1>, vector<1x128xf32>
    %106 = arith.addf %99, %105 : vector<1x128xf32>
    %c3_i32 = arith.constant 3 : i32
    %107 = vector.broadcast %c3_i32 : i32 to vector<1x128xi32>
    %108 = arith.cmpi eq, %86, %107 : vector<1x128xi32>
    %cst_20 = arith.constant 0.000000e+00 : f32
    %109 = vector.shape_cast %85 : vector<1x1xf32> to vector<1x1xf32>
    %110 = vector.broadcast %109 : vector<1x1xf32> to vector<1x128xf32>
    %111 = vector.broadcast %cst_20 : f32 to vector<1x128xf32>
    %112 = arith.select %108, %110, %111 : vector<1x128xi1>, vector<1x128xf32>
    %113 = arith.addf %106, %112 : vector<1x128xf32>
    %c0_21 = arith.constant 0 : index
    %c0_22 = arith.constant 0 : index
    %c0_23 = arith.constant 0 : index
    %114 = vector.load %arg3[%c0_21, %c0_22, %c0_23] : memref<1x1x128xf32, #tpu.memory_space<vmem>>, vector<1x1x128xf32>
    %115 = vector.shape_cast %114 : vector<1x1x128xf32> to vector<1x128xf32>
    %116 = vector.shape_cast %113 : vector<1x128xf32> to vector<1x1x128xf32>
    tpu.vector_store %arg3[%c0_21, %c0_22, %c0_23], %116 {strides = array<i32>} : memref<1x1x128xf32, #tpu.memory_space<vmem>>, vector<1x1x128xf32>,
    return
  }
  func.func @transform_0(%arg0: i32) -> (i32, i32) {
    %c0_i32 = arith.constant 0 : i32
    %c0_i32_0 = arith.constant 0 : i32
    return %arg0, %c0_i32 : i32, i32
  }
  func.func @transform_1(%arg0: i32) -> (i32, i32, i32) {
    %c0_i32 = arith.constant 0 : i32
    %c0_i32_0 = arith.constant 0 : i32
    %c0_i32_1 = arith.constant 0 : i32
    return %arg0, %c0_i32, %c0_i32_0 : i32, i32, i32
  }
  func.func @transform_2(%arg0: i32) -> (i32, i32, i32) {
    %c0_i32 = arith.constant 0 : i32
    %c0_i32_0 = arith.constant 0 : i32
    %c0_i32_1 = arith.constant 0 : i32
    return %arg0, %c0_i32, %c0_i32_0 : i32, i32, i32
  }
}

</mosaic_0001>

<llo_original>
// kernel: relation_loss.1
$region0: #{relation_loss.1}
  #allocation0 [shape = 'u32[]', space=smem, size = 0x4, offset = 0x4, fixed_abs, tag = 'smem constant byte address 0x4 - core index']
  #allocation1 [shape = 'u32[144,128]{1,0:T(1,128)}', space=vmem, size = 0x12000, scoped, tag = 'internal scratch']
  %s0 = inlined_call_operand.vmem [shape: f32[64,32], index: 0, kind: input, shape index: {}]
  %s1 = inlined_call_operand.vmem [shape: s32[1,1,64], index: 1, kind: input, shape index: {}]
  %s2 = inlined_call_operand.vmem [shape: f32[1,1,128], index: 2, kind: output, shape index: {}]
  %s3 = sld [smem:[#allocation0]]
  $region18: #{relation_loss.1} parent=0
    _
  %s5 = ssub.s32 1, %s3
  %s6 = scalar_select 0, %s5, %s3
  // Predicated region
  $region2: #{relation_loss.1} parent=0 // pred_check
    _
  $region3: #{relation_loss.1} parent=0 // pred_check_branch
    %8 = sbr.rel (0) target = $region5
  $region4: #{relation_loss.1} parent=0 // pred_region
    _
  $region5: #{relation_loss.1} parent=0 // pred_fallthru
    _
  // Predicated region
  $region6: #{relation_loss.1} parent=0 // pred_check
    _
  $region7: #{relation_loss.1} parent=0 // pred_check_branch
    %10 = sbr.rel (0) target = $region9
  $region8: #{relation_loss.1} parent=0 // pred_region
    _
  $region9: #{relation_loss.1} parent=0 // pred_fallthru
    _
  %v11 = vld [vmem:[%s1] sm:$0x1]
  %v12 = vld [vmem:[%s0] sm:$0xff]
  %v13 = vld [vmem:[%s0 + $0x8] sm:$0xff]
  %v14 = vld [vmem:[%s0 + $0x10] sm:$0xff]
  %v15 = vld [vmem:[%s0 + $0x18] sm:$0xff]
  %v16 = vld [vmem:[%s0 + $0x20] sm:$0xff]
  %v17 = vld [vmem:[%s0 + $0x28] sm:$0xff]
  %v18 = vld [vmem:[%s0 + $0x30] sm:$0xff]
  %v19 = vld [vmem:[%s0 + $0x38] sm:$0xff]
  %v20 = vlaneseq
  %v21 = vshrl.u32 %v20, 7
  %v22 = vadd.s32 %v21, 8
  %v23 = vadd.s32 %v21, 16
  %v24 = vadd.s32 %v21, 24
  %v25 = vlaneseq
  %v26 = vand.u32 %v25, 127
  %vm27 = vcmp.eq.s32.totalorder %v21, %v26
  %vm28 = vcmp.eq.s32.totalorder %v22, %v26
  %vm29 = vcmp.eq.s32.totalorder %v23, %v26
  %vm30 = vcmp.eq.s32.totalorder %v24, %v26
  %v31 = vsel %vm27, 1, 0
  %v32 = vsel %vm28, 1, 0
  %v33 = vsel %vm29, 1, 0
  %v34 = vsel %vm30, 1, 0
  %v35 = vcvt.s32.f32 %v31
  %v36 = vcvt.s32.f32 %v32
  %v37 = vcvt.s32.f32 %v33
  %v38 = vcvt.s32.f32 %v34
  %vm39 = vcmask 261120
  %v41 = vsel %vm39, %v35, 0
  %v44 = vsel %vm39, %v36, 0
  %v47 = vsel %vm39, %v37, 0
  %v50 = vsel %vm39, %v38, 0
  %v53 = vsel %vm39, %v12, 0
  %v56 = vsel %vm39, %v13, 0
  %v59 = vsel %vm39, %v14, 0
  %v62 = vsel %vm39, %v15, 0
  %v65 = vsel %vm39, %v16, 0
  %v68 = vsel %vm39, %v17, 0
  %v71 = vsel %vm39, %v18, 0
  %v74 = vsel %vm39, %v19, 0
  %76 = vmatprep.subr.mxu0 0.0
  %77 = vmatpush1.xpose.msra.mxu0 %v53
  %78 = vmatprep.subr.mxu0 0.0
  %79 = vmatpush1.xpose.msra.mxu0 %v56
  %80 = vmatprep.subr.mxu0 0.0
  %81 = vmatpush1.xpose.msra.mxu0 %v59
  %82 = vmatprep.subr.mxu0 0.0
  %83 = vmatpush1.xpose.msra.mxu0 %v62
  %84 = vmatprep.subr.mxu0 0.0
  %85 = vmatpush1.xpose.msra.mxu0 %v65
  %86 = vmatprep.subr.mxu0 0.0
  %87 = vmatpush1.xpose.msra.mxu0 %v68
  %88 = vmatprep.subr.mxu0 0.0
  %89 = vmatpush1.xpose.msra.mxu0 %v71
  %90 = vmatprep.subr.mxu0 0.0
  %91 = vmatpush1.xpose.msra.mxu0 %v74
  %92 = vmatprep.subr.mxu0 0.0
  %93 = vmatpush1.xpose.msra.mxu0 0.0
  %94 = vmatprep.subr.mxu0 0.0
  %95 = vmatpush1.xpose.msra.mxu0 0.0
  %96 = vmatprep.subr.mxu0 0.0
  %97 = vmatpush1.xpose.msra.mxu0 0.0
  %98 = vmatprep.subr.mxu0 0.0
  %99 = vmatpush1.xpose.msra.mxu0 0.0
  %100 = vmatprep.subr.mxu0 0.0
  %101 = vmatpush1.xpose.msra.mxu0 0.0
  %102 = vmatprep.subr.mxu0 0.0
  %103 = vmatpush1.xpose.msra.mxu0 0.0
  %104 = vmatprep.subr.mxu0 0.0
  %105 = vmatpush1.xpose.msra.mxu0 0.0
  %106 = vmatprep.subr.mxu0 0.0
  %107 = vmatpush1.xpose.msra.mxu0 0.0
  %108 = vmatprep.subr.mxu0 0.0
  %109 = vmatpush1.xpose.msra.mxu0 0.0
  %110 = vmatprep.subr.mxu0 0.0
  %111 = vmatpush1.xpose.msra.mxu0 0.0
  %112 = vmatprep.subr.mxu0 0.0
  %113 = vmatpush1.xpose.msra.mxu0 0.0
  %114 = vmatprep.subr.mxu0 0.0
  %115 = vmatpush1.xpose.msra.mxu0 0.0
  %116 = vmatprep.subr.mxu0 0.0
  %117 = vmatpush1.xpose.msra.mxu0 0.0
  %118 = vmatprep.subr.mxu0 0.0
  %119 = vmatpush1.xpose.msra.mxu0 0.0
  %120 = vmatprep.subr.mxu0 0.0
  %121 = vmatpush1.xpose.msra.mxu0 0.0
  %122 = vmatprep.subr.mxu0 0.0
  %123 = vmatpush1.xpose.msra.mxu0 0.0
  %124 = vmatprep.subr.mxu0 0.0
  %125 = vmatpush1.xpose.msra.mxu0 0.0
  %126 = vmatprep.subr.mxu0 0.0
  %127 = vmatpush1.xpose.msra.mxu0 0.0
  %128 = vmatprep.subr.mxu0 0.0
  %129 = vmatpush1.xpose.msra.mxu0 0.0
  %130 = vmatprep.subr.mxu0 0.0
  %131 = vmatpush1.xpose.msra.mxu0 0.0
  %132 = vmatprep.subr.mxu0 0.0
  %133 = vmatpush1.xpose.msra.mxu0 0.0
  %134 = vmatprep.subr.mxu0 0.0
  %135 = vmatpush1.xpose.msra.mxu0 0.0
  %136 = vmatprep.subr.mxu0 0.0
  %137 = vmatpush1.xpose.msra.mxu0 0.0
  %138 = vmatprep.subr.mxu0 0.0
  %139 = vmatpush1.xpose.msra.mxu0 0.0
  %140 = vmatprep.mubr.f32.mxu0 0.0
  %141 = vmatmul.mubr.f32.gmra.mrb[0].mxu0 %v41
  %v142 = vpop.f32.mrb[0].mxu0
  %v143 = vadd.f32 0.0, %v142
  %v144 = vpop.f32.mrb[0].mxu0
  %145 = vmatprep.mubr.f32.mxu0 0.0
  %146 = vmatmul.mubr.f32.gmra.mrb[0].mxu0 %v44
  %v147 = vpop.f32.mrb[0].mxu0
  %v148 = vadd.f32 0.0, %v147
  %v149 = vpop.f32.mrb[0].mxu0
  %150 = vmatprep.mubr.f32.mxu0 0.0
  %151 = vmatmul.mubr.f32.gmra.mrb[0].mxu0 %v47
  %v152 = vpop.f32.mrb[0].mxu0
  %v153 = vadd.f32 0.0, %v152
  %v154 = vpop.f32.mrb[0].mxu0
  %155 = vmatprep.mubr.f32.mxu0 0.0
  %156 = vmatmul.mubr.f32.gmra.mrb[0].mxu0 %v50
  %v157 = vpop.f32.mrb[0].mxu0
  %v158 = vadd.f32 0.0, %v157
  %v159 = vpop.f32.mrb[0].mxu0
  %160 = vdwg.mxu0
  %vm161 = vcmask 523264
  %v162 = vsel %vm161, %v143, -inf
  %v163 = vsel %vm161, %v148, -inf
  %v164 = vsel %vm161, %v153, -inf
  %v165 = vsel %vm161, %v158, -inf
  %v166 = vmax.f32 %v162, %v163
  %v167 = vmax.f32 %v164, %v165
  %v168 = vmax.f32 %v166, %v167
  %v169 = vrot.slane %v168, 4
  %v170 = vmax.f32 %v168, %v169
  %v171 = vrot.slane %v170, 2
  %v172 = vmax.f32 %v170, %v171
  %v173 = vrot.slane %v172, 1
  %v174 = vmax.f32 %v172, %v173
  %v175 = vsub.f32 %v143, %v174
  %v176 = vsub.f32 %v148, %v174
  %v177 = vsub.f32 %v153, %v174
  %v178 = vsub.f32 %v158, %v174
  %v179 = vmul.f32 %v175, 1.442695
  %v180 = vpow.pop %v179
  %v181 = vmul.f32 %v176, 1.442695
  %v182 = vpow.pop %v181
  %v183 = vmul.f32 %v177, 1.442695
  %v184 = vpow.pop %v183
  %v185 = vmul.f32 %v178, 1.442695
  %v186 = vpow.pop %v185
  %v187 = vsel %vm161, %v180, 0.0
  %v188 = vsel %vm161, %v182, 0.0
  %v189 = vadd.f32 %v187, %v188
  %v190 = vsel %vm161, %v184, 0.0
  %v191 = vadd.f32 %v189, %v190
  %v192 = vsel %vm161, %v186, 0.0
  %v193 = vadd.f32 %v191, %v192
  %v194 = vrot.slane %v193, 4
  %v195 = vadd.f32 %v193, %v194
  %v196 = vrot.slane %v195, 2
  %v197 = vadd.f32 %v195, %v196
  %v198 = vrot.slane %v197, 1
  %v199 = vadd.f32 %v197, %v198
  %v200 = vlog2.pop %v199
  %v201 = vmul.f32 %v200, 0.6931472
  %v202 = vadd.f32 %v174, %v201
  %v203 = vlaneseq
  %v204 = vshrl.u32 %v203, 7
  %v205 = vsub.s32 0, %v204
  %v206 = vrot.slane %v11, %v205
  %vm207 = vcmp.eq.s32.totalorder %v21, %v206
  %vm208 = vcmp.eq.s32.totalorder %v22, %v206
  %vm209 = vcmp.eq.s32.totalorder %v23, %v206
  %vm210 = vcmp.eq.s32.totalorder %v24, %v206
  %v211 = vsel %vm207, 1, 0
  %v212 = vsel %vm208, 1, 0
  %v213 = vsel %vm209, 1, 0
  %v214 = vsel %vm210, 1, 0
  %v215 = vcvt.s32.f32 %v211
  %v216 = vcvt.s32.f32 %v212
  %v217 = vcvt.s32.f32 %v213
  %v218 = vcvt.s32.f32 %v214
  %v219 = vmul.f32 %v143, %v215
  %v220 = vmul.f32 %v148, %v216
  %v221 = vmul.f32 %v153, %v217
  %v222 = vmul.f32 %v158, %v218
  %v223 = vsel %vm161, %v219, 0.0
  %v224 = vsel %vm161, %v220, 0.0
  %v225 = vadd.f32 %v223, %v224
  %v226 = vsel %vm161, %v221, 0.0
  %v227 = vadd.f32 %v225, %v226
  %v228 = vsel %vm161, %v222, 0.0
  %v229 = vadd.f32 %v227, %v228
  %v230 = vrot.slane %v229, 4
  %v231 = vadd.f32 %v229, %v230
  %v232 = vrot.slane %v231, 2
  %v233 = vadd.f32 %v231, %v232
  %v234 = vrot.slane %v233, 1
  %v235 = vadd.f32 %v233, %v234
  %v236 = vsub.f32 %v202, %v235
  %s237 = smul.u32 0, 64
  %v238 = vstv %s237
  %v239 = vadd.s32 %v238, %v26
  %vm240 = vcmp.lt.s32.totalorder %v239, 64
  %vm241 = vcmp.ge.s32.totalorder %v11, 0
  %vm242 = vcmp.lt.s32.totalorder %v11, 32
  %vm243 = vmand %vm241, %vm242
  %vm244 = vmand %vm240, %vm243
  %vm245 = vcmp.eq.s32.totalorder %v11, 0
  %vm246 = vcmp.eq.s32.totalorder %v11, 8
  %vm247 = vmor %vm245, %vm246
  %vm248 = vcmp.eq.s32.totalorder %v11, 20
  %vm249 = vmor %vm247, %vm248
  %vm250 = vcmp.eq.s32.totalorder %v11, 21
  %vm251 = vmor %vm249, %vm250
  %vm252 = vcmp.eq.s32.totalorder %v11, 29
  %vm253 = vmor %vm251, %vm252
  %vm254 = vcmp.eq.s32.totalorder %v11, 31
  %vm255 = vmor %vm253, %vm254
  %vm256 = vcmp.eq.s32.totalorder %v11, 38
  %vm257 = vmor %vm255, %vm256
  %vm258 = vcmp.eq.s32.totalorder %v11, 44
  %vm259 = vmor %vm257, %vm258
  %vm260 = vcmp.eq.s32.totalorder %v11, 49
  %vm261 = vmor %vm259, %vm260
  %vm262 = vmand %vm261, %vm244
  %vm263 = vmxor %vm261, 1
  %vm264 = vmand %vm263, %vm244
  %v265 = vsel %vm262, %v236, 0.0
  %vm266 = vcmask 516096
  %v267 = vsel %vm266, %v265, 0.0
  %268 = vadd.xlane.f32.xlu0 %v267
  %v269 = vpop.xlane.xlu0 %268
  %v270 = vsel %vm262, 1, 0
  %v271 = vcvt.s32.f32 %v270
  %v272 = vsel %vm266, %v271, 0.0
  %273 = vadd.xlane.f32.xlu0 %v272
  %v274 = vpop.xlane.xlu0 %273
  %v275 = vsel %vm264, %v236, 0.0
  %v276 = vsel %vm266, %v275, 0.0
  %277 = vadd.xlane.f32.xlu0 %v276
  %v278 = vpop.xlane.xlu0 %277
  %v279 = vsel %vm264, 1, 0
  %v280 = vcvt.s32.f32 %v279
  %v281 = vsel %vm266, %v280, 0.0
  %282 = vadd.xlane.f32.xlu0 %v281
  %v283 = vpop.xlane.xlu0 %282
  %vm284 = vcmp.eq.s32.totalorder %v26, 0
  %v285 = vsel %vm284, %v269, 0.0
  %vm286 = vcmp.eq.s32.totalorder %v26, 1
  %v287 = vsel %vm286, %v274, 0.0
  %v288 = vadd.f32 %v285, %v287
  %vm289 = vcmp.eq.s32.totalorder %v26, 2
  %v290 = vsel %vm289, %v278, 0.0
  %v291 = vadd.f32 %v288, %v290
  %vm292 = vcmp.eq.s32.totalorder %v26, 3
  %v293 = vsel %vm292, %v283, 0.0
  %v294 = vadd.f32 %v291, %v293
  %295 = vst [vmem:[%s2] sm:$0x1] %v294
  // Predicated region
  $region10: #{relation_loss.1} parent=0 // pred_check
    _
  $region11: #{relation_loss.1} parent=0 // pred_check_branch
    %297 = sbr.rel (0) target = $region13
  $region12: #{relation_loss.1} parent=0 // pred_region
    _
  $region13: #{relation_loss.1} parent=0 // pred_fallthru
    _
  // Predicated region
  $region14: #{relation_loss.1} parent=0 // pred_check
    _
  $region15: #{relation_loss.1} parent=0 // pred_check_branch
    %299 = sbr.rel (0) target = $region17
  $region16: #{relation_loss.1} parent=0 // pred_region
    _
  $region17: #{relation_loss.1} parent=0 // pred_fallthru
    _

</llo_original>
